<compile_context>
chip_gen: v7x
topology: tpu7x:2x2x1
jax: 0.10.0
libtpu: 0.0.40
codegen_flags: <defaults>
</compile_context>

<pallas_src>
import jax
import jax.numpy as jnp
from jax.experimental import pallas as pl
from jax.experimental.pallas import tpu as pltpu

EPS = 1e-5  # nn.BatchNorm2d default eps


def res_block_forward(x_nchw, w2, b2, gamma, beta):
    """x_nchw: (N, Cin, H, W) float32; w2: (Cout, Cin, 3, 3) (PyTorch OIHW)."""
    N, C, H, W = x_nchw.shape
    Cout = w2.shape[0]
    assert Cout == C, "ResBlock forward requires input_channel == output_channel"
    Cin = C
    Wp = W + 2                           # width incl. conv padding columns
    HWp = H * Wp                         # flattened spatial (2 junk cols/row)
    HpWp = (H + 3) * Wp                  # flattened padded-input spatial
    LP = ((HWp + 127) // 128) * 128      # per-image lane slot, 128-aligned
    LT = N * LP                          # total lane width (batch folded in)
    Kp = 9 * 8                           # 9 taps x 8-sublane-aligned slots

    # Conv bias is exactly absorbed by the batch-statistics BN mean -> no-op.
    del b2

    # ---- wrapper glue: pure layout (pad / reshape / transpose), no im2col ----
    # Padded input, flattened spatial: tap (dh, dw) for output column j is the
    # contiguous lane slice starting at dh*Wp + dw (length HWp).
    xflat = jnp.pad(x_nchw, ((0, 0), (0, 0), (1, 2), (1, 1))).reshape(N, Cin, HpWp)

    # Conv weight packed tap-major into 8-wide slots: wt[co, t*8 + ci].
    wt = jnp.transpose(w2, (0, 2, 3, 1)).reshape(Cout, 9, Cin)
    wt = jnp.pad(wt, ((0, 0), (0, 0), (0, 8 - Cin))).reshape(Cout, Kp)

    # Valid-column mask (junk conv columns and lane padding excluded from BN).
    m_img = jnp.pad(jnp.ones((H, W), jnp.float32),
                    ((0, 0), (0, Wp - W))).reshape(HWp)
    mask = jnp.tile(jnp.pad(m_img, (0, LP - HWp)), (N,)).reshape(1, LT)

    # Residual aligned to the (Cout, N*LP) conv-output layout.
    xres = jnp.pad(x_nchw, ((0, 0), (0, 0), (0, 0), (0, Wp - W))).reshape(N, C, HWp)
    xres = jnp.pad(xres, ((0, 0), (0, 0), (0, LP - HWp)))
    xres = jnp.transpose(xres, (1, 0, 2)).reshape(C, LT)

    gamma2 = gamma.reshape(Cout, 1).astype(jnp.float32)
    beta2 = beta.reshape(Cout, 1).astype(jnp.float32)

    inv_cnt = 1.0 / float(N * H * W)

    # -------------------- single fused kernel --------------------
    def fused_kernel(xflat_ref, wt_ref, mask_ref, xres_ref, g_ref, b_ref,
                     out_ref, xt_ref):
        # Zero the tap scratch once: pad rows / pad lanes must be 0 so stale
        # VMEM contents cannot poison the matmul or the BN statistics.
        xt_ref[...] = jnp.zeros_like(xt_ref)

        # Assemble the 9 shifted taps for every image: tap slots are 8-sublane
        # aligned (t*8), per-image lane slots are 128-lane aligned (n*LP), and
        # each tap is a contiguous lane slice of the padded flattened input.
        for n in range(N):
            for dh in range(3):
                for dw in range(3):
                    t = dh * 3 + dw
                    off = dh * Wp + dw
                    xt_ref[t * 8:t * 8 + Cin, n * LP:n * LP + HWp] = \
                        xflat_ref[n, :, off:off + HWp]

        # One fused MXU matmul over the whole batch: (Cout, 72) @ (72, N*LP).
        acc = jnp.dot(wt_ref[...], xt_ref[...],
                      preferred_element_type=jnp.float32)      # (Cout, LT)

        # BatchNorm (training mode): biased per-channel stats over valid cols.
        am = acc * mask_ref[...]
        mean = jnp.sum(am, axis=1, keepdims=True) * inv_cnt      # (Cout, 1)
        var = jnp.sum(acc * am, axis=1, keepdims=True) * inv_cnt - mean * mean
        var = jnp.maximum(var, 0.0)
        scale = g_ref[...] * jax.lax.rsqrt(var + EPS)            # EUP rsqrt
        shift = b_ref[...] - mean * scale

        # Apply BN (one FMA) + residual + ReLU; dense 128-aligned lane store.
        out_ref[...] = jnp.maximum(acc * scale + shift + xres_ref[...],
                                   0.0).astype(out_ref.dtype)

    cost = pl.CostEstimate(
        flops=2 * Cout * Kp * LT + 10 * Cout * LT,
        transcendentals=Cout,
        bytes_accessed=4 * (N * Cin * HpWp + Cout * Kp + LT
                            + 2 * Cout * LT + 2 * Cout))

    out_slab = pl.pallas_call(
        fused_kernel,
        grid=(1,),
        in_specs=[
            pl.BlockSpec((N, Cin, HpWp), lambda i: (0, 0, 0)),
            pl.BlockSpec((Cout, Kp), lambda i: (0, 0)),
            pl.BlockSpec((1, LT), lambda i: (0, 0)),
            pl.BlockSpec((Cout, LT), lambda i: (0, 0)),
            pl.BlockSpec((Cout, 1), lambda i: (0, 0)),
            pl.BlockSpec((Cout, 1), lambda i: (0, 0)),
        ],
        out_specs=pl.BlockSpec((Cout, LT), lambda i: (0, 0)),
        out_shape=jax.ShapeDtypeStruct((Cout, LT), x_nchw.dtype),
        scratch_shapes=[pltpu.VMEM((Kp, LT), jnp.float32)],
        compiler_params=pltpu.CompilerParams(
            dimension_semantics=("arbitrary",)),
        cost_estimate=cost,
    )(xflat, wt, mask, xres, gamma2, beta2)

    # Strip lane padding + junk columns and restore NCHW.
    out = out_slab.reshape(Cout, N, LP)[:, :, :HWp]
    out = jnp.transpose(out, (1, 0, 2)).reshape(N, Cout, H, Wp)[:, :, :, :W]
    return out


def res_block_ref(x_nchw, w2, b2, gamma, beta):
    """Pure-JAX f32 reference of the same forward pass (for validation)."""
    y = jax.lax.conv_general_dilated(
        x_nchw, w2, window_strides=(1, 1), padding=((1, 1), (1, 1)),
        dimension_numbers=("NCHW", "OIHW", "NCHW"))
    y = y + b2.reshape(1, -1, 1, 1)
    mean = jnp.mean(y, axis=(0, 2, 3), keepdims=True)
    var = jnp.mean((y - mean) ** 2, axis=(0, 2, 3), keepdims=True)
    y = (y - mean) * jax.lax.rsqrt(var + EPS)
    y = y * gamma.reshape(1, -1, 1, 1) + beta.reshape(1, -1, 1, 1)
    y = y + x_nchw
    return jnp.maximum(y, 0.0)


if __name__ == "__main__":
    # ResBlock(input_channel=4, output_channel=4) at small shapes.
    N, C, H, W = 2, 4, 16, 16
    Cout = C

    key = jax.random.PRNGKey(0)
    k_x, k_w2, k_b2 = jax.random.split(key, 3)

    x = jax.random.normal(k_x, (N, C, H, W), jnp.float32)

    # Deterministic parameter init mimicking nn.Conv2d defaults.  conv1 / bn2
    # exist in the module but are dead code for the returned value.
    fan_in = C * 3 * 3
    bound = 1.0 / (fan_in ** 0.5)
    w2 = jax.random.uniform(k_w2, (Cout, C, 3, 3), jnp.float32, -bound, bound)
    b2 = jax.random.uniform(k_b2, (Cout,), jnp.float32, -bound, bound)
    gamma = jnp.ones((Cout,), jnp.float32)   # bn1.weight default init
    beta = jnp.zeros((Cout,), jnp.float32)   # bn1.bias default init

    fwd = jax.jit(res_block_forward)
    out = jax.block_until_ready(fwd(x, w2, b2, gamma, beta))

    ref = res_block_ref(x, w2, b2, gamma, beta)
    max_err = float(jnp.max(jnp.abs(out - ref)))
    assert jnp.allclose(out, ref, atol=1e-4, rtol=1e-4), f"max_err={max_err}"

    print("KERNEL_OK")
</pallas_src>

<mosaic_0001>
module attributes {stable_mosaic.version = 11 : i64} {
  func.func @fused_kernel(%arg0: i32, %arg1: memref<2x4x342xf32, #tpu.memory_space<vmem>>, %arg2: memref<4x72xf32, #tpu.memory_space<vmem>>, %arg3: memref<1x768xf32, #tpu.memory_space<vmem>>, %arg4: memref<4x768xf32, #tpu.memory_space<vmem>>, %arg5: memref<4x1xf32, #tpu.memory_space<vmem>>, %arg6: memref<4x1xf32, #tpu.memory_space<vmem>>, %arg7: memref<4x768xf32, #tpu.memory_space<vmem>>, %arg8: memref<72x768xf32, #tpu.memory_space<vmem>>) attributes {dimension_semantics = [#tpu.dimension_semantics<arbitrary>], iteration_bounds = array<i64: 1>, scalar_prefetch = 0 : i64, scratch_operands = 1 : i64, tpu.core_type = #tpu.core_type<tc>, window_params = [{pipeline_mode = #tpu.pipeline_mode<synchronous>, transform_indices = @transform_0, window_bounds = array<i64: 2, 4, 342>}, {pipeline_mode = #tpu.pipeline_mode<synchronous>, transform_indices = @transform_1, window_bounds = array<i64: 4, 72>}, {pipeline_mode = #tpu.pipeline_mode<synchronous>, transform_indices = @transform_2, window_bounds = array<i64: 1, 768>}, {pipeline_mode = #tpu.pipeline_mode<synchronous>, transform_indices = @transform_3, window_bounds = array<i64: 4, 768>}, {pipeline_mode = #tpu.pipeline_mode<synchronous>, transform_indices = @transform_4, window_bounds = array<i64: 4, 1>}, {pipeline_mode = #tpu.pipeline_mode<synchronous>, transform_indices = @transform_5, window_bounds = array<i64: 4, 1>}, {pipeline_mode = #tpu.pipeline_mode<synchronous>, transform_indices = @transform_6, window_bounds = array<i64: 4, 768>}]} {
    %cst = arith.constant 0.000000e+00 : f32
    %0 = vector.broadcast %cst : f32 to vector<72x768xf32>
    %c0 = arith.constant 0 : index
    %c0_0 = arith.constant 0 : index
    %1 = vector.load %arg8[%c0, %c0_0] : memref<72x768xf32, #tpu.memory_space<vmem>>, vector<72x768xf32>
    tpu.vector_store %arg8[%c0, %c0_0], %0 {strides = array<i32>} : memref<72x768xf32, #tpu.memory_space<vmem>>, vector<72x768xf32>,
    %c0_1 = arith.constant 0 : index
    %c0_2 = arith.constant 0 : index
    %c0_3 = arith.constant 0 : index
    %2 = vector.load %arg1[%c0_1, %c0_2, %c0_3] : memref<2x4x342xf32, #tpu.memory_space<vmem>>, vector<1x4x288xf32>
    %3 = vector.shape_cast %2 : vector<1x4x288xf32> to vector<4x288xf32>
    %c0_4 = arith.constant 0 : index
    %c0_5 = arith.constant 0 : index
    %4 = vector.load %arg8[%c0_4, %c0_5] : memref<72x768xf32, #tpu.memory_space<vmem>>, vector<4x288xf32>
    tpu.vector_store %arg8[%c0_4, %c0_5], %3 {strides = array<i32>} : memref<72x768xf32, #tpu.memory_space<vmem>>, vector<4x288xf32>,
    %c0_6 = arith.constant 0 : index
    %c0_7 = arith.constant 0 : index
    %c1 = arith.constant 1 : index
    %5 = vector.load %arg1[%c0_6, %c0_7, %c1] : memref<2x4x342xf32, #tpu.memory_space<vmem>>, vector<1x4x288xf32>
    %6 = vector.shape_cast %5 : vector<1x4x288xf32> to vector<4x288xf32>
    %c8 = arith.constant 8 : index
    %c0_8 = arith.constant 0 : index
    %7 = vector.load %arg8[%c8, %c0_8] : memref<72x768xf32, #tpu.memory_space<vmem>>, vector<4x288xf32>
    tpu.vector_store %arg8[%c8, %c0_8], %6 {strides = array<i32>} : memref<72x768xf32, #tpu.memory_space<vmem>>, vector<4x288xf32>,
    %c0_9 = arith.constant 0 : index
    %c0_10 = arith.constant 0 : index
    %c2 = arith.constant 2 : index
    %8 = vector.load %arg1[%c0_9, %c0_10, %c2] : memref<2x4x342xf32, #tpu.memory_space<vmem>>, vector<1x4x288xf32>
    %9 = vector.shape_cast %8 : vector<1x4x288xf32> to vector<4x288xf32>
    %c16 = arith.constant 16 : index
    %c0_11 = arith.constant 0 : index
    %10 = vector.load %arg8[%c16, %c0_11] : memref<72x768xf32, #tpu.memory_space<vmem>>, vector<4x288xf32>
    tpu.vector_store %arg8[%c16, %c0_11], %9 {strides = array<i32>} : memref<72x768xf32, #tpu.memory_space<vmem>>, vector<4x288xf32>,
    %c0_12 = arith.constant 0 : index
    %c0_13 = arith.constant 0 : index
    %c18 = arith.constant 18 : index
    %11 = vector.load %arg1[%c0_12, %c0_13, %c18] : memref<2x4x342xf32, #tpu.memory_space<vmem>>, vector<1x4x288xf32>
    %12 = vector.shape_cast %11 : vector<1x4x288xf32> to vector<4x288xf32>
    %c24 = arith.constant 24 : index
    %c0_14 = arith.constant 0 : index
    %13 = vector.load %arg8[%c24, %c0_14] : memref<72x768xf32, #tpu.memory_space<vmem>>, vector<4x288xf32>
    tpu.vector_store %arg8[%c24, %c0_14], %12 {strides = array<i32>} : memref<72x768xf32, #tpu.memory_space<vmem>>, vector<4x288xf32>,
    %c0_15 = arith.constant 0 : index
    %c0_16 = arith.constant 0 : index
    %c19 = arith.constant 19 : index
    %14 = vector.load %arg1[%c0_15, %c0_16, %c19] : memref<2x4x342xf32, #tpu.memory_space<vmem>>, vector<1x4x288xf32>
    %15 = vector.shape_cast %14 : vector<1x4x288xf32> to vector<4x288xf32>
    %c32 = arith.constant 32 : index
    %c0_17 = arith.constant 0 : index
    %16 = vector.load %arg8[%c32, %c0_17] : memref<72x768xf32, #tpu.memory_space<vmem>>, vector<4x288xf32>
    tpu.vector_store %arg8[%c32, %c0_17], %15 {strides = array<i32>} : memref<72x768xf32, #tpu.memory_space<vmem>>, vector<4x288xf32>,
    %c0_18 = arith.constant 0 : index
    %c0_19 = arith.constant 0 : index
    %c20 = arith.constant 20 : index
    %17 = vector.load %arg1[%c0_18, %c0_19, %c20] : memref<2x4x342xf32, #tpu.memory_space<vmem>>, vector<1x4x288xf32>
    %18 = vector.shape_cast %17 : vector<1x4x288xf32> to vector<4x288xf32>
    %c40 = arith.constant 40 : index
    %c0_20 = arith.constant 0 : index
    %19 = vector.load %arg8[%c40, %c0_20] : memref<72x768xf32, #tpu.memory_space<vmem>>, vector<4x288xf32>
    tpu.vector_store %arg8[%c40, %c0_20], %18 {strides = array<i32>} : memref<72x768xf32, #tpu.memory_space<vmem>>, vector<4x288xf32>,
    %c0_21 = arith.constant 0 : index
    %c0_22 = arith.constant 0 : index
    %c36 = arith.constant 36 : index
    %20 = vector.load %arg1[%c0_21, %c0_22, %c36] : memref<2x4x342xf32, #tpu.memory_space<vmem>>, vector<1x4x288xf32>
    %21 = vector.shape_cast %20 : vector<1x4x288xf32> to vector<4x288xf32>
    %c48 = arith.constant 48 : index
    %c0_23 = arith.constant 0 : index
    %22 = vector.load %arg8[%c48, %c0_23] : memref<72x768xf32, #tpu.memory_space<vmem>>, vector<4x288xf32>
    tpu.vector_store %arg8[%c48, %c0_23], %21 {strides = array<i32>} : memref<72x768xf32, #tpu.memory_space<vmem>>, vector<4x288xf32>,
    %c0_24 = arith.constant 0 : index
    %c0_25 = arith.constant 0 : index
    %c37 = arith.constant 37 : index
    %23 = vector.load %arg1[%c0_24, %c0_25, %c37] : memref<2x4x342xf32, #tpu.memory_space<vmem>>, vector<1x4x288xf32>
    %24 = vector.shape_cast %23 : vector<1x4x288xf32> to vector<4x288xf32>
    %c56 = arith.constant 56 : index
    %c0_26 = arith.constant 0 : index
    %25 = vector.load %arg8[%c56, %c0_26] : memref<72x768xf32, #tpu.memory_space<vmem>>, vector<4x288xf32>
    tpu.vector_store %arg8[%c56, %c0_26], %24 {strides = array<i32>} : memref<72x768xf32, #tpu.memory_space<vmem>>, vector<4x288xf32>,
    %c0_27 = arith.constant 0 : index
    %c0_28 = arith.constant 0 : index
    %c38 = arith.constant 38 : index
    %26 = vector.load %arg1[%c0_27, %c0_28, %c38] : memref<2x4x342xf32, #tpu.memory_space<vmem>>, vector<1x4x288xf32>
    %27 = vector.shape_cast %26 : vector<1x4x288xf32> to vector<4x288xf32>
    %c64 = arith.constant 64 : index
    %c0_29 = arith.constant 0 : index
    %28 = vector.load %arg8[%c64, %c0_29] : memref<72x768xf32, #tpu.memory_space<vmem>>, vector<4x288xf32>
    tpu.vector_store %arg8[%c64, %c0_29], %27 {strides = array<i32>} : memref<72x768xf32, #tpu.memory_space<vmem>>, vector<4x288xf32>,
    %c1_30 = arith.constant 1 : index
    %c0_31 = arith.constant 0 : index
    %c0_32 = arith.constant 0 : index
    %29 = vector.load %arg1[%c1_30, %c0_31, %c0_32] : memref<2x4x342xf32, #tpu.memory_space<vmem>>, vector<1x4x288xf32>
    %30 = vector.shape_cast %29 : vector<1x4x288xf32> to vector<4x288xf32>
    %c0_33 = arith.constant 0 : index
    %c384 = arith.constant 384 : index
    %31 = vector.load %arg8[%c0_33, %c384] : memref<72x768xf32, #tpu.memory_space<vmem>>, vector<4x288xf32>
    tpu.vector_store %arg8[%c0_33, %c384], %30 {strides = array<i32>} : memref<72x768xf32, #tpu.memory_space<vmem>>, vector<4x288xf32>,
    %c1_34 = arith.constant 1 : index
    %c0_35 = arith.constant 0 : index
    %c1_36 = arith.constant 1 : index
    %32 = vector.load %arg1[%c1_34, %c0_35, %c1_36] : memref<2x4x342xf32, #tpu.memory_space<vmem>>, vector<1x4x288xf32>
    %33 = vector.shape_cast %32 : vector<1x4x288xf32> to vector<4x288xf32>
    %c8_37 = arith.constant 8 : index
    %c384_38 = arith.constant 384 : index
    %34 = vector.load %arg8[%c8_37, %c384_38] : memref<72x768xf32, #tpu.memory_space<vmem>>, vector<4x288xf32>
    tpu.vector_store %arg8[%c8_37, %c384_38], %33 {strides = array<i32>} : memref<72x768xf32, #tpu.memory_space<vmem>>, vector<4x288xf32>,
    %c1_39 = arith.constant 1 : index
    %c0_40 = arith.constant 0 : index
    %c2_41 = arith.constant 2 : index
    %35 = vector.load %arg1[%c1_39, %c0_40, %c2_41] : memref<2x4x342xf32, #tpu.memory_space<vmem>>, vector<1x4x288xf32>
    %36 = vector.shape_cast %35 : vector<1x4x288xf32> to vector<4x288xf32>
    %c16_42 = arith.constant 16 : index
    %c384_43 = arith.constant 384 : index
    %37 = vector.load %arg8[%c16_42, %c384_43] : memref<72x768xf32, #tpu.memory_space<vmem>>, vector<4x288xf32>
    tpu.vector_store %arg8[%c16_42, %c384_43], %36 {strides = array<i32>} : memref<72x768xf32, #tpu.memory_space<vmem>>, vector<4x288xf32>,
    %c1_44 = arith.constant 1 : index
    %c0_45 = arith.constant 0 : index
    %c18_46 = arith.constant 18 : index
    %38 = vector.load %arg1[%c1_44, %c0_45, %c18_46] : memref<2x4x342xf32, #tpu.memory_space<vmem>>, vector<1x4x288xf32>
    %39 = vector.shape_cast %38 : vector<1x4x288xf32> to vector<4x288xf32>
    %c24_47 = arith.constant 24 : index
    %c384_48 = arith.constant 384 : index
    %40 = vector.load %arg8[%c24_47, %c384_48] : memref<72x768xf32, #tpu.memory_space<vmem>>, vector<4x288xf32>
    tpu.vector_store %arg8[%c24_47, %c384_48], %39 {strides = array<i32>} : memref<72x768xf32, #tpu.memory_space<vmem>>, vector<4x288xf32>,
    %c1_49 = arith.constant 1 : index
    %c0_50 = arith.constant 0 : index
    %c19_51 = arith.constant 19 : index
    %41 = vector.load %arg1[%c1_49, %c0_50, %c19_51] : memref<2x4x342xf32, #tpu.memory_space<vmem>>, vector<1x4x288xf32>
    %42 = vector.shape_cast %41 : vector<1x4x288xf32> to vector<4x288xf32>
    %c32_52 = arith.constant 32 : index
    %c384_53 = arith.constant 384 : index
    %43 = vector.load %arg8[%c32_52, %c384_53] : memref<72x768xf32, #tpu.memory_space<vmem>>, vector<4x288xf32>
    tpu.vector_store %arg8[%c32_52, %c384_53], %42 {strides = array<i32>} : memref<72x768xf32, #tpu.memory_space<vmem>>, vector<4x288xf32>,
    %c1_54 = arith.constant 1 : index
    %c0_55 = arith.constant 0 : index
    %c20_56 = arith.constant 20 : index
    %44 = vector.load %arg1[%c1_54, %c0_55, %c20_56] : memref<2x4x342xf32, #tpu.memory_space<vmem>>, vector<1x4x288xf32>
    %45 = vector.shape_cast %44 : vector<1x4x288xf32> to vector<4x288xf32>
    %c40_57 = arith.constant 40 : index
    %c384_58 = arith.constant 384 : index
    %46 = vector.load %arg8[%c40_57, %c384_58] : memref<72x768xf32, #tpu.memory_space<vmem>>, vector<4x288xf32>
    tpu.vector_store %arg8[%c40_57, %c384_58], %45 {strides = array<i32>} : memref<72x768xf32, #tpu.memory_space<vmem>>, vector<4x288xf32>,
    %c1_59 = arith.constant 1 : index
    %c0_60 = arith.constant 0 : index
    %c36_61 = arith.constant 36 : index
    %47 = vector.load %arg1[%c1_59, %c0_60, %c36_61] : memref<2x4x342xf32, #tpu.memory_space<vmem>>, vector<1x4x288xf32>
    %48 = vector.shape_cast %47 : vector<1x4x288xf32> to vector<4x288xf32>
    %c48_62 = arith.constant 48 : index
    %c384_63 = arith.constant 384 : index
    %49 = vector.load %arg8[%c48_62, %c384_63] : memref<72x768xf32, #tpu.memory_space<vmem>>, vector<4x288xf32>
    tpu.vector_store %arg8[%c48_62, %c384_63], %48 {strides = array<i32>} : memref<72x768xf32, #tpu.memory_space<vmem>>, vector<4x288xf32>,
    %c1_64 = arith.constant 1 : index
    %c0_65 = arith.constant 0 : index
    %c37_66 = arith.constant 37 : index
    %50 = vector.load %arg1[%c1_64, %c0_65, %c37_66] : memref<2x4x342xf32, #tpu.memory_space<vmem>>, vector<1x4x288xf32>
    %51 = vector.shape_cast %50 : vector<1x4x288xf32> to vector<4x288xf32>
    %c56_67 = arith.constant 56 : index
    %c384_68 = arith.constant 384 : index
    %52 = vector.load %arg8[%c56_67, %c384_68] : memref<72x768xf32, #tpu.memory_space<vmem>>, vector<4x288xf32>
    tpu.vector_store %arg8[%c56_67, %c384_68], %51 {strides = array<i32>} : memref<72x768xf32, #tpu.memory_space<vmem>>, vector<4x288xf32>,
    %c1_69 = arith.constant 1 : index
    %c0_70 = arith.constant 0 : index
    %c38_71 = arith.constant 38 : index
    %53 = vector.load %arg1[%c1_69, %c0_70, %c38_71] : memref<2x4x342xf32, #tpu.memory_space<vmem>>, vector<1x4x288xf32>
    %54 = vector.shape_cast %53 : vector<1x4x288xf32> to vector<4x288xf32>
    %c64_72 = arith.constant 64 : index
    %c384_73 = arith.constant 384 : index
    %55 = vector.load %arg8[%c64_72, %c384_73] : memref<72x768xf32, #tpu.memory_space<vmem>>, vector<4x288xf32>
    tpu.vector_store %arg8[%c64_72, %c384_73], %54 {strides = array<i32>} : memref<72x768xf32, #tpu.memory_space<vmem>>, vector<4x288xf32>,
    %c0_74 = arith.constant 0 : index
    %c0_75 = arith.constant 0 : index
    %56 = vector.load %arg2[%c0_74, %c0_75] : memref<4x72xf32, #tpu.memory_space<vmem>>, vector<4x72xf32>
    %c0_76 = arith.constant 0 : index
    %c0_77 = arith.constant 0 : index
    %57 = vector.load %arg8[%c0_76, %c0_77] : memref<72x768xf32, #tpu.memory_space<vmem>>, vector<72x768xf32>
    %cst_78 = arith.constant dense<0.000000e+00> : vector<4x768xf32>
    %58 = tpu.matmul %56, %57, %cst_78 {dimension_numbers = #tpu.dot_dimension_numbers<[1], [0], [0], [1], [0, 0, 1, 1], [], []>} : vector<4x72xf32>, vector<72x768xf32>, vector<4x768xf32> -> vector<4x768xf32>
    %c0_79 = arith.constant 0 : index
    %c0_80 = arith.constant 0 : index
    %59 = vector.load %arg3[%c0_79, %c0_80] : memref<1x768xf32, #tpu.memory_space<vmem>>, vector<1x768xf32>
    %60 = vector.broadcast %59 : vector<1x768xf32> to vector<4x768xf32>
    %61 = arith.mulf %58, %60 : vector<4x768xf32>
    %cst_81 = arith.constant dense<0.000000e+00> : vector<4xf32>
    %62 = vector.multi_reduction <add>, %61, %cst_81 [1] : vector<4x768xf32> to vector<4xf32>
    %63 = vector.shape_cast %62 : vector<4xf32> to vector<4x1xf32>
    %cst_82 = arith.constant 0.001953125 : f32
    %64 = vector.broadcast %cst_82 : f32 to vector<4x1xf32>
    %65 = arith.mulf %63, %64 : vector<4x1xf32>
    %66 = arith.mulf %58, %61 : vector<4x768xf32>
    %cst_83 = arith.constant dense<0.000000e+00> : vector<4xf32>
    %67 = vector.multi_reduction <add>, %66, %cst_83 [1] : vector<4x768xf32> to vector<4xf32>
    %68 = vector.shape_cast %67 : vector<4xf32> to vector<4x1xf32>
    %cst_84 = arith.constant 0.001953125 : f32
    %69 = vector.broadcast %cst_84 : f32 to vector<4x1xf32>
    %70 = arith.mulf %68, %69 : vector<4x1xf32>
    %71 = arith.mulf %65, %65 : vector<4x1xf32>
    %72 = arith.subf %70, %71 : vector<4x1xf32>
    %cst_85 = arith.constant 0.000000e+00 : f32
    %73 = vector.broadcast %cst_85 : f32 to vector<4x1xf32>
    %74 = arith.maximumf %72, %73 : vector<4x1xf32>
    %c0_86 = arith.constant 0 : index
    %c0_87 = arith.constant 0 : index
    %75 = vector.load %arg5[%c0_86, %c0_87] : memref<4x1xf32, #tpu.memory_space<vmem>>, vector<4x1xf32>
    %cst_88 = arith.constant 9.99999974E-6 : f32
    %76 = vector.broadcast %cst_88 : f32 to vector<4x1xf32>
    %77 = arith.addf %74, %76 : vector<4x1xf32>
    %78 = math.rsqrt %77 : vector<4x1xf32>
    %79 = arith.mulf %75, %78 : vector<4x1xf32>
    %c0_89 = arith.constant 0 : index
    %c0_90 = arith.constant 0 : index
    %80 = vector.load %arg6[%c0_89, %c0_90] : memref<4x1xf32, #tpu.memory_space<vmem>>, vector<4x1xf32>
    %81 = arith.mulf %65, %79 : vector<4x1xf32>
    %82 = arith.subf %80, %81 : vector<4x1xf32>
    %83 = vector.broadcast %79 : vector<4x1xf32> to vector<4x768xf32>
    %84 = arith.mulf %58, %83 : vector<4x768xf32>
    %85 = vector.broadcast %82 : vector<4x1xf32> to vector<4x768xf32>
    %86 = arith.addf %84, %85 : vector<4x768xf32>
    %c0_91 = arith.constant 0 : index
    %c0_92 = arith.constant 0 : index
    %87 = vector.load %arg4[%c0_91, %c0_92] : memref<4x768xf32, #tpu.memory_space<vmem>>, vector<4x768xf32>
    %88 = arith.addf %86, %87 : vector<4x768xf32>
    %cst_93 = arith.constant 0.000000e+00 : f32
    %89 = vector.broadcast %cst_93 : f32 to vector<4x768xf32>
    %90 = arith.maximumf %88, %89 : vector<4x768xf32>
    %c0_94 = arith.constant 0 : index
    %c0_95 = arith.constant 0 : index
    %91 = vector.load %arg7[%c0_94, %c0_95] : memref<4x768xf32, #tpu.memory_space<vmem>>, vector<4x768xf32>
    tpu.vector_store %arg7[%c0_94, %c0_95], %90 {strides = array<i32>} : memref<4x768xf32, #tpu.memory_space<vmem>>, vector<4x768xf32>,
    return
  }
  func.func @transform_0(%arg0: i32) -> (i32, i32, i32) {
    %c0_i32 = arith.constant 0 : i32
    %c0_i32_0 = arith.constant 0 : i32
    %c0_i32_1 = arith.constant 0 : i32
    %c0_i32_2 = arith.constant 0 : i32
    return %c0_i32, %c0_i32_0, %c0_i32_1 : i32, i32, i32
  }
  func.func @transform_1(%arg0: i32) -> (i32, i32) {
    %c0_i32 = arith.constant 0 : i32
    %c0_i32_0 = arith.constant 0 : i32
    %c0_i32_1 = arith.constant 0 : i32
    return %c0_i32, %c0_i32_0 : i32, i32
  }
  func.func @transform_2(%arg0: i32) -> (i32, i32) {
    %c0_i32 = arith.constant 0 : i32
    %c0_i32_0 = arith.constant 0 : i32
    %c0_i32_1 = arith.constant 0 : i32
    return %c0_i32, %c0_i32_0 : i32, i32
  }
  func.func @transform_3(%arg0: i32) -> (i32, i32) {
    %c0_i32 = arith.constant 0 : i32
    %c0_i32_0 = arith.constant 0 : i32
    %c0_i32_1 = arith.constant 0 : i32
    return %c0_i32, %c0_i32_0 : i32, i32
  }
  func.func @transform_4(%arg0: i32) -> (i32, i32) {
    %c0_i32 = arith.constant 0 : i32
    %c0_i32_0 = arith.constant 0 : i32
    %c0_i32_1 = arith.constant 0 : i32
    return %c0_i32, %c0_i32_0 : i32, i32
  }
  func.func @transform_5(%arg0: i32) -> (i32, i32) {
    %c0_i32 = arith.constant 0 : i32
    %c0_i32_0 = arith.constant 0 : i32
    %c0_i32_1 = arith.constant 0 : i32
    return %c0_i32, %c0_i32_0 : i32, i32
  }
  func.func @transform_6(%arg0: i32) -> (i32, i32) {
    %c0_i32 = arith.constant 0 : i32
    %c0_i32_0 = arith.constant 0 : i32
    %c0_i32_1 = arith.constant 0 : i32
    return %c0_i32, %c0_i32_0 : i32, i32
  }
}

</mosaic_0001>

<llo_original>
// kernel: res_block_forward.1
$region0: #{res_block_forward.1}
  #allocation0 [shape = 'u32[]', space=smem, size = 0x4, offset = 0x4, fixed_abs, tag = 'smem constant byte address 0x4 - core index']
  #allocation1 [shape = 'u32[144,128]{1,0:T(1,128)}', space=vmem, size = 0x12000, scoped, tag = 'internal scratch']
  #allocation2 [shape = 'f32[72,768]{1,0:T(8,128)}', space=vmem, size = 0x36000, scoped, tag = 'scratch operand']
  %s0 = inlined_call_operand.vmem [shape: f32[2,4,342], index: 0, kind: input, shape index: {}]
  %s1 = inlined_call_operand.vmem [shape: f32[4,72], index: 1, kind: input, shape index: {}]
  %s2 = inlined_call_operand.vmem [shape: f32[1,768], index: 2, kind: input, shape index: {}]
  %s3 = inlined_call_operand.vmem [shape: f32[4,768], index: 3, kind: input, shape index: {}]
  %s4 = inlined_call_operand.vmem [shape: f32[4,1], index: 4, kind: input, shape index: {}]
  %s5 = inlined_call_operand.vmem [shape: f32[4,1], index: 5, kind: input, shape index: {}]
  %s6 = inlined_call_operand.vmem [shape: f32[4,768], index: 6, kind: output, shape index: {}]
  %s7 = sld [smem:[#allocation0]]
  $region34: #{res_block_forward.1} parent=0
    _
  %s9 = ssub.s32 1, %s7
  %s10 = scalar_select 0, %s9, %s7
  // Predicated region
  $region2: #{res_block_forward.1} parent=0 // pred_check
    _
  $region3: #{res_block_forward.1} parent=0 // pred_check_branch
    %12 = sbr.rel (0) target = $region5
  $region4: #{res_block_forward.1} parent=0 // pred_region
    _
  $region5: #{res_block_forward.1} parent=0 // pred_fallthru
    _
  // Predicated region
  $region6: #{res_block_forward.1} parent=0 // pred_check
    _
  $region7: #{res_block_forward.1} parent=0 // pred_check_branch
    %14 = sbr.rel (0) target = $region9
  $region8: #{res_block_forward.1} parent=0 // pred_region
    _
  $region9: #{res_block_forward.1} parent=0 // pred_fallthru
    _
  // Predicated region
  $region10: #{res_block_forward.1} parent=0 // pred_check
    _
  $region11: #{res_block_forward.1} parent=0 // pred_check_branch
    %16 = sbr.rel (0) target = $region13
  $region12: #{res_block_forward.1} parent=0 // pred_region
    _
  $region13: #{res_block_forward.1} parent=0 // pred_fallthru
    _
  // Predicated region
  $region14: #{res_block_forward.1} parent=0 // pred_check
    _
  $region15: #{res_block_forward.1} parent=0 // pred_check_branch
    %18 = sbr.rel (0) target = $region17
  $region16: #{res_block_forward.1} parent=0 // pred_region
    _
  $region17: #{res_block_forward.1} parent=0 // pred_fallthru
    _
  // Predicated region
  $region18: #{res_block_forward.1} parent=0 // pred_check
    _
  $region19: #{res_block_forward.1} parent=0 // pred_check_branch
    %20 = sbr.rel (0) target = $region21
  $region20: #{res_block_forward.1} parent=0 // pred_region
    _
  $region21: #{res_block_forward.1} parent=0 // pred_fallthru
    _
  // Predicated region
  $region22: #{res_block_forward.1} parent=0 // pred_check
    _
  $region23: #{res_block_forward.1} parent=0 // pred_check_branch
    %22 = sbr.rel (0) target = $region25
  $region24: #{res_block_forward.1} parent=0 // pred_region
    _
  $region25: #{res_block_forward.1} parent=0 // pred_fallthru
    _
  %23 = vst [vmem:[#allocation2] sm:$0xff] 0.0
  %24 = vst [vmem:[#allocation2 + $0x8] sm:$0xff] 0.0
  %25 = vst [vmem:[#allocation2 + $0x10] sm:$0xff] 0.0
  %26 = vst [vmem:[#allocation2 + $0x18] sm:$0xff] 0.0
  %27 = vst [vmem:[#allocation2 + $0x20] sm:$0xff] 0.0
  %28 = vst [vmem:[#allocation2 + $0x28] sm:$0xff] 0.0
  %29 = vst [vmem:[#allocation2 + $0x30] sm:$0xff] 0.0
  %30 = vst [vmem:[#allocation2 + $0x38] sm:$0xff] 0.0
  %31 = vst [vmem:[#allocation2 + $0x40] sm:$0xff] 0.0
  %32 = vst [vmem:[#allocation2 + $0x48] sm:$0xff] 0.0
  %33 = vst [vmem:[#allocation2 + $0x50] sm:$0xff] 0.0
  %34 = vst [vmem:[#allocation2 + $0x58] sm:$0xff] 0.0
  %35 = vst [vmem:[#allocation2 + $0x60] sm:$0xff] 0.0
  %36 = vst [vmem:[#allocation2 + $0x68] sm:$0xff] 0.0
  %37 = vst [vmem:[#allocation2 + $0x70] sm:$0xff] 0.0
  %38 = vst [vmem:[#allocation2 + $0x78] sm:$0xff] 0.0
  %39 = vst [vmem:[#allocation2 + $0x80] sm:$0xff] 0.0
  %40 = vst [vmem:[#allocation2 + $0x88] sm:$0xff] 0.0
  %41 = vst [vmem:[#allocation2 + $0x90] sm:$0xff] 0.0
  %42 = vst [vmem:[#allocation2 + $0x98] sm:$0xff] 0.0
  %43 = vst [vmem:[#allocation2 + $0xa0] sm:$0xff] 0.0
  %44 = vst [vmem:[#allocation2 + $0xa8] sm:$0xff] 0.0
  %45 = vst [vmem:[#allocation2 + $0xb0] sm:$0xff] 0.0
  %46 = vst [vmem:[#allocation2 + $0xb8] sm:$0xff] 0.0
  %47 = vst [vmem:[#allocation2 + $0xc0] sm:$0xff] 0.0
  %48 = vst [vmem:[#allocation2 + $0xc8] sm:$0xff] 0.0
  %49 = vst [vmem:[#allocation2 + $0xd0] sm:$0xff] 0.0
  %50 = vst [vmem:[#allocation2 + $0xd8] sm:$0xff] 0.0
  %51 = vst [vmem:[#allocation2 + $0xe0] sm:$0xff] 0.0
  %52 = vst [vmem:[#allocation2 + $0xe8] sm:$0xff] 0.0
  %53 = vst [vmem:[#allocation2 + $0xf0] sm:$0xff] 0.0
  %54 = vst [vmem:[#allocation2 + $0xf8] sm:$0xff] 0.0
  %55 = vst [vmem:[#allocation2 + $0x100] sm:$0xff] 0.0
  %56 = vst [vmem:[#allocation2 + $0x108] sm:$0xff] 0.0
  %57 = vst [vmem:[#allocation2 + $0x110] sm:$0xff] 0.0
  %58 = vst [vmem:[#allocation2 + $0x118] sm:$0xff] 0.0
  %59 = vst [vmem:[#allocation2 + $0x120] sm:$0xff] 0.0
  %60 = vst [vmem:[#allocation2 + $0x128] sm:$0xff] 0.0
  %61 = vst [vmem:[#allocation2 + $0x130] sm:$0xff] 0.0
  %62 = vst [vmem:[#allocation2 + $0x138] sm:$0xff] 0.0
  %63 = vst [vmem:[#allocation2 + $0x140] sm:$0xff] 0.0
  %64 = vst [vmem:[#allocation2 + $0x148] sm:$0xff] 0.0
  %65 = vst [vmem:[#allocation2 + $0x150] sm:$0xff] 0.0
  %66 = vst [vmem:[#allocation2 + $0x158] sm:$0xff] 0.0
  %67 = vst [vmem:[#allocation2 + $0x160] sm:$0xff] 0.0
  %68 = vst [vmem:[#allocation2 + $0x168] sm:$0xff] 0.0
  %69 = vst [vmem:[#allocation2 + $0x170] sm:$0xff] 0.0
  %70 = vst [vmem:[#allocation2 + $0x178] sm:$0xff] 0.0
  %71 = vst [vmem:[#allocation2 + $0x180] sm:$0xff] 0.0
  %72 = vst [vmem:[#allocation2 + $0x188] sm:$0xff] 0.0
  %73 = vst [vmem:[#allocation2 + $0x190] sm:$0xff] 0.0
  %74 = vst [vmem:[#allocation2 + $0x198] sm:$0xff] 0.0
  %75 = vst [vmem:[#allocation2 + $0x1a0] sm:$0xff] 0.0
  %76 = vst [vmem:[#allocation2 + $0x1a8] sm:$0xff] 0.0
  %v77 = vld [vmem:[%s0] sm:$0xff]
  %v78 = vld [vmem:[%s0 + $0x8] sm:$0xf]
  %v80 = vcombine.high %v77, %v77
  %82 = vst [vmem:[#allocation2] sm:$0xf] %v77
  %83 = vst [vmem:[#allocation2 + $0x8] sm:$0xf] %v80
  %vm84 = vcmask 257024
  %85 = vst.msk [vmem:[#allocation2 + $0x10] sm:$0xf] %vm84, %v78
  %v86 = vld [vmem:[%s0] sm:$0xff]
  %v87 = vld [vmem:[%s0 + $0x8] sm:$0xf]
  %v90 = vcombine.high %v86, %v86
  %91 = vrot.lane.b32.xlu0 %v86, 127
  %v92 = vpop.permute.xlu0 %91
  %93 = vrot.lane.b32.xlu0 %v90, 127
  %v94 = vpop.permute.xlu0 %93
  %95 = vrot.lane.b32.xlu0 %v87, 127
  %v96 = vpop.permute.xlu0 %95
  %vm97 = vcmask 1039360
  %v98 = vsel %vm97, %v92, %v94
  %v99 = vsel %vm97, %v94, %v96
  %103 = vst [vmem:[#allocation2 + $0x30] sm:$0xf] %v98
  %104 = vst [vmem:[#allocation2 + $0x38] sm:$0xf] %v99
  %105 = vst.msk [vmem:[#allocation2 + $0x40] sm:$0xf] %vm84, %v96
  %v106 = vld [vmem:[%s0] sm:$0xff]
  %v107 = vld [vmem:[%s0 + $0x8] sm:$0xf]
  %v110 = vcombine.high %v106, %v106
  %111 = vrot.lane.b32.xlu0 %v106, 126
  %v112 = vpop.permute.xlu0 %111
  %113 = vrot.lane.b32.xlu0 %v110, 126
  %v114 = vpop.permute.xlu0 %113
  %115 = vrot.lane.b32.xlu0 %v107, 126
  %v116 = vpop.permute.xlu0 %115
  %vm117 = vcmask 1031168
  %v118 = vsel %vm117, %v112, %v114
  %v119 = vsel %vm117, %v114, %v116
  %123 = vst [vmem:[#allocation2 + $0x60] sm:$0xf] %v118
  %124 = vst [vmem:[#allocation2 + $0x68] sm:$0xf] %v119
  %125 = vst.msk [vmem:[#allocation2 + $0x70] sm:$0xf] %vm84, %v116
  %v126 = vld [vmem:[%s0] sm:$0xff]
  %v127 = vld [vmem:[%s0 + $0x8] sm:$0xf]
  %v130 = vcombine.high %v126, %v126
  %131 = vrot.lane.b32.xlu0 %v126, 110
  %v132 = vpop.permute.xlu0 %131
  %133 = vrot.lane.b32.xlu0 %v130, 110
  %v134 = vpop.permute.xlu0 %133
  %135 = vrot.lane.b32.xlu0 %v127, 110
  %v136 = vpop.permute.xlu0 %135
  %vm137 = vcmask 900096
  %v138 = vsel %vm137, %v132, %v134
  %v139 = vsel %vm137, %v134, %v136
  %143 = vst [vmem:[#allocation2 + $0x90] sm:$0xf] %v138
  %144 = vst [vmem:[#allocation2 + $0x98] sm:$0xf] %v139
  %145 = vst.msk [vmem:[#allocation2 + $0xa0] sm:$0xf] %vm84, %v136
  %v146 = vld [vmem:[%s0] sm:$0xff]
  %v147 = vld [vmem:[%s0 + $0x8] sm:$0xf]
  %v150 = vcombine.high %v146, %v146
  %151 = vrot.lane.b32.xlu0 %v146, 109
  %v152 = vpop.permute.xlu0 %151
  %153 = vrot.lane.b32.xlu0 %v150, 109
  %v154 = vpop.permute.xlu0 %153
  %155 = vrot.lane.b32.xlu0 %v147, 109
  %v156 = vpop.permute.xlu0 %155
  %vm157 = vcmask 891904
  %v158 = vsel %vm157, %v152, %v154
  %v159 = vsel %vm157, %v154, %v156
  %163 = vst [vmem:[#allocation2 + $0xc0] sm:$0xf] %v158
  %164 = vst [vmem:[#allocation2 + $0xc8] sm:$0xf] %v159
  %165 = vst.msk [vmem:[#allocation2 + $0xd0] sm:$0xf] %vm84, %v156
  %v166 = vld [vmem:[%s0] sm:$0xff]
  %v167 = vld [vmem:[%s0 + $0x8] sm:$0xf]
  %v170 = vcombine.high %v166, %v166
  %171 = vrot.lane.b32.xlu0 %v166, 108
  %v172 = vpop.permute.xlu0 %171
  %173 = vrot.lane.b32.xlu0 %v170, 108
  %v174 = vpop.permute.xlu0 %173
  %175 = vrot.lane.b32.xlu0 %v167, 108
  %v176 = vpop.permute.xlu0 %175
  %vm177 = vcmask 883712
  %v178 = vsel %vm177, %v172, %v174
  %v179 = vsel %vm177, %v174, %v176
  %183 = vst [vmem:[#allocation2 + $0xf0] sm:$0xf] %v178
  %184 = vst [vmem:[#allocation2 + $0xf8] sm:$0xf] %v179
  %185 = vst.msk [vmem:[#allocation2 + $0x100] sm:$0xf] %vm84, %v176
  %v186 = vld [vmem:[%s0] sm:$0xff]
  %v187 = vld [vmem:[%s0 + $0x8] sm:$0xf]
  %v190 = vcombine.high %v186, %v186
  %191 = vrot.lane.b32.xlu0 %v186, 92
  %v192 = vpop.permute.xlu0 %191
  %193 = vrot.lane.b32.xlu0 %v190, 92
  %v194 = vpop.permute.xlu0 %193
  %195 = vrot.lane.b32.xlu0 %v187, 92
  %v196 = vpop.permute.xlu0 %195
  %vm197 = vcmask 752640
  %v198 = vsel %vm197, %v192, %v194
  %v199 = vsel %vm197, %v194, %v196
  %203 = vst [vmem:[#allocation2 + $0x120] sm:$0xf] %v198
  %204 = vst [vmem:[#allocation2 + $0x128] sm:$0xf] %v199
  %205 = vst.msk [vmem:[#allocation2 + $0x130] sm:$0xf] %vm84, %v196
  %v206 = vld [vmem:[%s0] sm:$0xff]
  %v207 = vld [vmem:[%s0 + $0x8] sm:$0xf]
  %v210 = vcombine.high %v206, %v206
  %211 = vrot.lane.b32.xlu0 %v206, 91
  %v212 = vpop.permute.xlu0 %211
  %213 = vrot.lane.b32.xlu0 %v210, 91
  %v214 = vpop.permute.xlu0 %213
  %215 = vrot.lane.b32.xlu0 %v207, 91
  %v216 = vpop.permute.xlu0 %215
  %vm217 = vcmask 744448
  %v218 = vsel %vm217, %v212, %v214
  %v219 = vsel %vm217, %v214, %v216
  %223 = vst [vmem:[#allocation2 + $0x150] sm:$0xf] %v218
  %224 = vst [vmem:[#allocation2 + $0x158] sm:$0xf] %v219
  %225 = vst.msk [vmem:[#allocation2 + $0x160] sm:$0xf] %vm84, %v216
  %v226 = vld [vmem:[%s0] sm:$0xff]
  %v227 = vld [vmem:[%s0 + $0x8] sm:$0xf]
  %v230 = vcombine.high %v226, %v226
  %231 = vrot.lane.b32.xlu0 %v226, 90
  %v232 = vpop.permute.xlu0 %231
  %233 = vrot.lane.b32.xlu0 %v230, 90
  %v234 = vpop.permute.xlu0 %233
  %235 = vrot.lane.b32.xlu0 %v227, 90
  %v236 = vpop.permute.xlu0 %235
  %vm237 = vcmask 736256
  %v238 = vsel %vm237, %v232, %v234
  %v239 = vsel %vm237, %v234, %v236
  %243 = vst [vmem:[#allocation2 + $0x180] sm:$0xf] %v238
  %244 = vst [vmem:[#allocation2 + $0x188] sm:$0xf] %v239
  %245 = vst.msk [vmem:[#allocation2 + $0x190] sm:$0xf] %vm84, %v236
  %s246 = scalar_lea.vmem %s0, 12
  %v247 = vld [vmem:[%s246] sm:$0xff]
  %v248 = vld [vmem:[%s246 + $0x8] sm:$0xf]
  %v250 = vcombine.high %v247, %v247
  %252 = vst [vmem:[#allocation2 + $0x18] sm:$0xf] %v247
  %253 = vst [vmem:[#allocation2 + $0x20] sm:$0xf] %v250
  %254 = vst.msk [vmem:[#allocation2 + $0x28] sm:$0xf] %vm84, %v248
  %v255 = vld [vmem:[%s246] sm:$0xff]
  %v256 = vld [vmem:[%s246 + $0x8] sm:$0xf]
  %v259 = vcombine.high %v255, %v255
  %260 = vrot.lane.b32.xlu0 %v255, 127
  %v261 = vpop.permute.xlu0 %260
  %262 = vrot.lane.b32.xlu0 %v259, 127
  %v263 = vpop.permute.xlu0 %262
  %264 = vrot.lane.b32.xlu0 %v256, 127
  %v265 = vpop.permute.xlu0 %264
  %v266 = vsel %vm97, %v261, %v263
  %v267 = vsel %vm97, %v263, %v265
  %271 = vst [vmem:[#allocation2 + $0x48] sm:$0xf] %v266
  %272 = vst [vmem:[#allocation2 + $0x50] sm:$0xf] %v267
  %273 = vst.msk [vmem:[#allocation2 + $0x58] sm:$0xf] %vm84, %v265
  %v274 = vld [vmem:[%s246] sm:$0xff]
  %v275 = vld [vmem:[%s246 + $0x8] sm:$0xf]
  %v278 = vcombine.high %v274, %v274
  %279 = vrot.lane.b32.xlu0 %v274, 126
  %v280 = vpop.permute.xlu0 %279
  %281 = vrot.lane.b32.xlu0 %v278, 126
  %v282 = vpop.permute.xlu0 %281
  %283 = vrot.lane.b32.xlu0 %v275, 126
  %v284 = vpop.permute.xlu0 %283
  %v285 = vsel %vm117, %v280, %v282
  %v286 = vsel %vm117, %v282, %v284
  %290 = vst [vmem:[#allocation2 + $0x78] sm:$0xf] %v285
  %291 = vst [vmem:[#allocation2 + $0x80] sm:$0xf] %v286
  %292 = vst.msk [vmem:[#allocation2 + $0x88] sm:$0xf] %vm84, %v284
  %v293 = vld [vmem:[%s246] sm:$0xff]
  %v294 = vld [vmem:[%s246 + $0x8] sm:$0xf]
  %v297 = vcombine.high %v293, %v293
  %298 = vrot.lane.b32.xlu0 %v293, 110
  %v299 = vpop.permute.xlu0 %298
  %300 = vrot.lane.b32.xlu0 %v297, 110
  %v301 = vpop.permute.xlu0 %300
  %302 = vrot.lane.b32.xlu0 %v294, 110
  %v303 = vpop.permute.xlu0 %302
  %v304 = vsel %vm137, %v299, %v301
  %v305 = vsel %vm137, %v301, %v303
  %309 = vst [vmem:[#allocation2 + $0xa8] sm:$0xf] %v304
  %310 = vst [vmem:[#allocation2 + $0xb0] sm:$0xf] %v305
  %311 = vst.msk [vmem:[#allocation2 + $0xb8] sm:$0xf] %vm84, %v303
  %v312 = vld [vmem:[%s246] sm:$0xff]
  %v313 = vld [vmem:[%s246 + $0x8] sm:$0xf]
  %v316 = vcombine.high %v312, %v312
  %317 = vrot.lane.b32.xlu0 %v312, 109
  %v318 = vpop.permute.xlu0 %317
  %319 = vrot.lane.b32.xlu0 %v316, 109
  %v320 = vpop.permute.xlu0 %319
  %321 = vrot.lane.b32.xlu0 %v313, 109
  %v322 = vpop.permute.xlu0 %321
  %v323 = vsel %vm157, %v318, %v320
  %v324 = vsel %vm157, %v320, %v322
  %328 = vst [vmem:[#allocation2 + $0xd8] sm:$0xf] %v323
  %329 = vst [vmem:[#allocation2 + $0xe0] sm:$0xf] %v324
  %330 = vst.msk [vmem:[#allocation2 + $0xe8] sm:$0xf] %vm84, %v322
  %v331 = vld [vmem:[%s246] sm:$0xff]
  %v332 = vld [vmem:[%s246 + $0x8] sm:$0xf]
  %v335 = vcombine.high %v331, %v331
  %336 = vrot.lane.b32.xlu0 %v331, 108
  %v337 = vpop.permute.xlu0 %336
  %338 = vrot.lane.b32.xlu0 %v335, 108
  %v339 = vpop.permute.xlu0 %338
  %340 = vrot.lane.b32.xlu0 %v332, 108
  %v341 = vpop.permute.xlu0 %340
  %v342 = vsel %vm177, %v337, %v339
  %v343 = vsel %vm177, %v339, %v341
  %347 = vst [vmem:[#allocation2 + $0x108] sm:$0xf] %v342
  %348 = vst [vmem:[#allocation2 + $0x110] sm:$0xf] %v343
  %349 = vst.msk [vmem:[#allocation2 + $0x118] sm:$0xf] %vm84, %v341
  %v350 = vld [vmem:[%s246] sm:$0xff]
  %v351 = vld [vmem:[%s246 + $0x8] sm:$0xf]
  %v354 = vcombine.high %v350, %v350
  %355 = vrot.lane.b32.xlu0 %v350, 92
  %v356 = vpop.permute.xlu0 %355
  %357 = vrot.lane.b32.xlu0 %v354, 92
  %v358 = vpop.permute.xlu0 %357
  %359 = vrot.lane.b32.xlu0 %v351, 92
  %v360 = vpop.permute.xlu0 %359
  %v361 = vsel %vm197, %v356, %v358
  %v362 = vsel %vm197, %v358, %v360
  %366 = vst [vmem:[#allocation2 + $0x138] sm:$0xf] %v361
  %367 = vst [vmem:[#allocation2 + $0x140] sm:$0xf] %v362
  %368 = vst.msk [vmem:[#allocation2 + $0x148] sm:$0xf] %vm84, %v360
  %v369 = vld [vmem:[%s246] sm:$0xff]
  %v370 = vld [vmem:[%s246 + $0x8] sm:$0xf]
  %v373 = vcombine.high %v369, %v369
  %374 = vrot.lane.b32.xlu0 %v369, 91
  %v375 = vpop.permute.xlu0 %374
  %376 = vrot.lane.b32.xlu0 %v373, 91
  %v377 = vpop.permute.xlu0 %376
  %378 = vrot.lane.b32.xlu0 %v370, 91
  %v379 = vpop.permute.xlu0 %378
  %v380 = vsel %vm217, %v375, %v377
  %v381 = vsel %vm217, %v377, %v379
  %385 = vst [vmem:[#allocation2 + $0x168] sm:$0xf] %v380
  %386 = vst [vmem:[#allocation2 + $0x170] sm:$0xf] %v381
  %387 = vst.msk [vmem:[#allocation2 + $0x178] sm:$0xf] %vm84, %v379
  %v388 = vld [vmem:[%s246] sm:$0xff]
  %v389 = vld [vmem:[%s246 + $0x8] sm:$0xf]
  %v392 = vcombine.high %v388, %v388
  %393 = vrot.lane.b32.xlu0 %v388, 90
  %v394 = vpop.permute.xlu0 %393
  %395 = vrot.lane.b32.xlu0 %v392, 90
  %v396 = vpop.permute.xlu0 %395
  %397 = vrot.lane.b32.xlu0 %v389, 90
  %v398 = vpop.permute.xlu0 %397
  %v399 = vsel %vm237, %v394, %v396
  %v400 = vsel %vm237, %v396, %v398
  %404 = vst [vmem:[#allocation2 + $0x198] sm:$0xf] %v399
  %405 = vst [vmem:[#allocation2 + $0x1a0] sm:$0xf] %v400
  %406 = vst.msk [vmem:[#allocation2 + $0x1a8] sm:$0xf] %vm84, %v398
  %v407 = vld [vmem:[%s1] sm:$0xf]
  %v408 = vld [vmem:[#allocation2] sm:$0xff]
  %v409 = vld [vmem:[#allocation2 + $0x8] sm:$0xff]
  %v410 = vld [vmem:[#allocation2 + $0x10] sm:$0xff]
  %v411 = vld [vmem:[#allocation2 + $0x18] sm:$0xff]
  %v412 = vld [vmem:[#allocation2 + $0x20] sm:$0xff]
  %v413 = vld [vmem:[#allocation2 + $0x28] sm:$0xff]
  %v414 = vld [vmem:[#allocation2 + $0x30] sm:$0xff]
  %v415 = vld [vmem:[#allocation2 + $0x38] sm:$0xff]
  %v416 = vld [vmem:[#allocation2 + $0x40] sm:$0xff]
  %v417 = vld [vmem:[#allocation2 + $0x48] sm:$0xff]
  %v418 = vld [vmem:[#allocation2 + $0x50] sm:$0xff]
  %v419 = vld [vmem:[#allocation2 + $0x58] sm:$0xff]
  %v420 = vld [vmem:[#allocation2 + $0x60] sm:$0xff]
  %v421 = vld [vmem:[#allocation2 + $0x68] sm:$0xff]
  %v422 = vld [vmem:[#allocation2 + $0x70] sm:$0xff]
  %v423 = vld [vmem:[#allocation2 + $0x78] sm:$0xff]
  %v424 = vld [vmem:[#allocation2 + $0x80] sm:$0xff]
  %v425 = vld [vmem:[#allocation2 + $0x88] sm:$0xff]
  %v426 = vld [vmem:[#allocation2 + $0x90] sm:$0xff]
  %v427 = vld [vmem:[#allocation2 + $0x98] sm:$0xff]
  %v428 = vld [vmem:[#allocation2 + $0xa0] sm:$0xff]
  %v429 = vld [vmem:[#allocation2 + $0xa8] sm:$0xff]
  %v430 = vld [vmem:[#allocation2 + $0xb0] sm:$0xff]
  %v431 = vld [vmem:[#allocation2 + $0xb8] sm:$0xff]
  %v432 = vld [vmem:[#allocation2 + $0xc0] sm:$0xff]
  %v433 = vld [vmem:[#allocation2 + $0xc8] sm:$0xff]
  %v434 = vld [vmem:[#allocation2 + $0xd0] sm:$0xff]
  %v435 = vld [vmem:[#allocation2 + $0xd8] sm:$0xff]
  %v436 = vld [vmem:[#allocation2 + $0xe0] sm:$0xff]
  %v437 = vld [vmem:[#allocation2 + $0xe8] sm:$0xff]
  %v438 = vld [vmem:[#allocation2 + $0xf0] sm:$0xff]
  %v439 = vld [vmem:[#allocation2 + $0xf8] sm:$0xff]
  %v440 = vld [vmem:[#allocation2 + $0x100] sm:$0xff]
  %v441 = vld [vmem:[#allocation2 + $0x108] sm:$0xff]
  %v442 = vld [vmem:[#allocation2 + $0x110] sm:$0xff]
  %v443 = vld [vmem:[#allocation2 + $0x118] sm:$0xff]
  %v444 = vld [vmem:[#allocation2 + $0x120] sm:$0xff]
  %v445 = vld [vmem:[#allocation2 + $0x128] sm:$0xff]
  %v446 = vld [vmem:[#allocation2 + $0x130] sm:$0xff]
  %v447 = vld [vmem:[#allocation2 + $0x138] sm:$0xff]
  %v448 = vld [vmem:[#allocation2 + $0x140] sm:$0xff]
  %v449 = vld [vmem:[#allocation2 + $0x148] sm:$0xff]
  %v450 = vld [vmem:[#allocation2 + $0x150] sm:$0xff]
  %v451 = vld [vmem:[#allocation2 + $0x158] sm:$0xff]
  %v452 = vld [vmem:[#allocation2 + $0x160] sm:$0xff]
  %v453 = vld [vmem:[#allocation2 + $0x168] sm:$0xff]
  %v454 = vld [vmem:[#allocation2 + $0x170] sm:$0xff]
  %v455 = vld [vmem:[#allocation2 + $0x178] sm:$0xff]
  %v456 = vld [vmem:[#allocation2 + $0x180] sm:$0xff]
  %v457 = vld [vmem:[#allocation2 + $0x188] sm:$0xff]
  %v458 = vld [vmem:[#allocation2 + $0x190] sm:$0xff]
  %v459 = vld [vmem:[#allocation2 + $0x198] sm:$0xff]
  %v460 = vld [vmem:[#allocation2 + $0x1a0] sm:$0xff]
  %v461 = vld [vmem:[#allocation2 + $0x1a8] sm:$0xff]
  %vm462 = vcmask 588800
  %v464 = vsel %vm462, %v407, 0
  %466 = vmatprep.subr.mxu0 %v409
  %467 = vmatpush1.msra.mxu0 %v408
  %468 = vmatprep.subr.mxu0 %v415
  %469 = vmatpush1.msra.mxu0 %v414
  %470 = vmatprep.subr.mxu0 %v421
  %471 = vmatpush1.msra.mxu0 %v420
  %472 = vmatprep.subr.mxu0 %v427
  %473 = vmatpush1.msra.mxu0 %v426
  %474 = vmatprep.subr.mxu0 %v433
  %475 = vmatpush1.msra.mxu0 %v432
  %476 = vmatprep.subr.mxu0 %v439
  %477 = vmatpush1.msra.mxu0 %v438
  %478 = vmatprep.subr.mxu0 %v445
  %479 = vmatpush1.msra.mxu0 %v444
  %480 = vmatprep.subr.mxu0 %v451
  %481 = vmatpush1.msra.mxu0 %v450
  %482 = vmatprep.subr.mxu0 %v457
  %483 = vmatpush1.msra.mxu0 %v456
  %484 = vmatprep.subr.mxu0 0.0
  %485 = vmatpush1.msra.mxu0 0.0
  %486 = vmatprep.subr.mxu0 0.0
  %487 = vmatpush1.msra.mxu0 0.0
  %488 = vmatprep.subr.mxu0 0.0
  %489 = vmatpush1.msra.mxu0 0.0
  %490 = vmatprep.subr.mxu0 0.0
  %491 = vmatpush1.msra.mxu0 0.0
  %492 = vmatprep.subr.mxu0 0.0
  %493 = vmatpush1.msra.mxu0 0.0
  %494 = vmatprep.subr.mxu0 0.0
  %495 = vmatpush1.msra.mxu0 0.0
  %496 = vmatprep.subr.mxu0 0.0
  %497 = vmatpush1.msra.mxu0 0.0
  %498 = vmatprep.subr.mxu0 0.0
  %499 = vmatpush1.msra.mxu0 0.0
  %500 = vmatprep.subr.mxu0 0.0
  %501 = vmatpush1.msra.mxu0 0.0
  %502 = vmatprep.subr.mxu0 0.0
  %503 = vmatpush1.msra.mxu0 0.0
  %504 = vmatprep.subr.mxu0 0.0
  %505 = vmatpush1.msra.mxu0 0.0
  %506 = vmatprep.subr.mxu0 0.0
  %507 = vmatpush1.msra.mxu0 0.0
  %508 = vmatprep.subr.mxu0 0.0
  %509 = vmatpush1.msra.mxu0 0.0
  %510 = vmatprep.subr.mxu0 0.0
  %511 = vmatpush1.msra.mxu0 0.0
  %512 = vmatprep.subr.mxu0 0.0
  %513 = vmatpush1.msra.mxu0 0.0
  %514 = vmatprep.subr.mxu0 0.0
  %515 = vmatpush1.msra.mxu0 0.0
  %516 = vmatprep.subr.mxu0 0.0
  %517 = vmatpush1.msra.mxu0 0.0
  %518 = vmatprep.subr.mxu0 0.0
  %519 = vmatpush1.msra.mxu0 0.0
  %520 = vmatprep.subr.mxu0 0.0
  %521 = vmatpush1.msra.mxu0 0.0
  %522 = vmatprep.subr.mxu0 0.0
  %523 = vmatpush1.msra.mxu0 0.0
  %524 = vmatprep.subr.mxu0 0.0
  %525 = vmatpush1.msra.mxu0 0.0
  %526 = vmatprep.subr.mxu0 0.0
  %527 = vmatpush1.msra.mxu0 0.0
  %528 = vmatprep.subr.mxu0 0.0
  %529 = vmatpush1.msra.mxu0 0.0
  %530 = vmatprep.mubr.f32.mxu0 0.0
  %531 = vmatmul.mubr.f32.gmra.mrb[0].mxu0 %v464
  %v532 = vpop.f32.mrb[0].mxu0
  %v533 = vadd.f32 0.0, %v532
  %v534 = vpop.f32.mrb[0].mxu0
  %v535 = vadd.f32 0.0, %v534
  %536 = vdwg.mxu0
  %537 = vmatprep.subr.mxu0 %v411
  %538 = vmatpush1.msra.mxu0 %v410
  %539 = vmatprep.subr.mxu0 %v417
  %540 = vmatpush1.msra.mxu0 %v416
  %541 = vmatprep.subr.mxu0 %v423
  %542 = vmatpush1.msra.mxu0 %v422
  %543 = vmatprep.subr.mxu0 %v429
  %544 = vmatpush1.msra.mxu0 %v428
  %545 = vmatprep.subr.mxu0 %v435
  %546 = vmatpush1.msra.mxu0 %v434
  %547 = vmatprep.subr.mxu0 %v441
  %548 = vmatpush1.msra.mxu0 %v440
  %549 = vmatprep.subr.mxu0 %v447
  %550 = vmatpush1.msra.mxu0 %v446
  %551 = vmatprep.subr.mxu0 %v453
  %552 = vmatpush1.msra.mxu0 %v452
  %553 = vmatprep.subr.mxu0 %v459
  %554 = vmatpush1.msra.mxu0 %v458
  %555 = vmatprep.subr.mxu0 0.0
  %556 = vmatpush1.msra.mxu0 0.0
  %557 = vmatprep.subr.mxu0 0.0
  %558 = vmatpush1.msra.mxu0 0.0
  %559 = vmatprep.subr.mxu0 0.0
  %560 = vmatpush1.msra.mxu0 0.0
  %561 = vmatprep.subr.mxu0 0.0
  %562 = vmatpush1.msra.mxu0 0.0
  %563 = vmatprep.subr.mxu0 0.0
  %564 = vmatpush1.msra.mxu0 0.0
  %565 = vmatprep.subr.mxu0 0.0
  %566 = vmatpush1.msra.mxu0 0.0
  %567 = vmatprep.subr.mxu0 0.0
  %568 = vmatpush1.msra.mxu0 0.0
  %569 = vmatprep.subr.mxu0 0.0
  %570 = vmatpush1.msra.mxu0 0.0
  %571 = vmatprep.subr.mxu0 0.0
  %572 = vmatpush1.msra.mxu0 0.0
  %573 = vmatprep.subr.mxu0 0.0
  %574 = vmatpush1.msra.mxu0 0.0
  %575 = vmatprep.subr.mxu0 0.0
  %576 = vmatpush1.msra.mxu0 0.0
  %577 = vmatprep.subr.mxu0 0.0
  %578 = vmatpush1.msra.mxu0 0.0
  %579 = vmatprep.subr.mxu0 0.0
  %580 = vmatpush1.msra.mxu0 0.0
  %581 = vmatprep.subr.mxu0 0.0
  %582 = vmatpush1.msra.mxu0 0.0
  %583 = vmatprep.subr.mxu0 0.0
  %584 = vmatpush1.msra.mxu0 0.0
  %585 = vmatprep.subr.mxu0 0.0
  %586 = vmatpush1.msra.mxu0 0.0
  %587 = vmatprep.subr.mxu0 0.0
  %588 = vmatpush1.msra.mxu0 0.0
  %589 = vmatprep.subr.mxu0 0.0
  %590 = vmatpush1.msra.mxu0 0.0
  %591 = vmatprep.subr.mxu0 0.0
  %592 = vmatpush1.msra.mxu0 0.0
  %593 = vmatprep.subr.mxu0 0.0
  %594 = vmatpush1.msra.mxu0 0.0
  %595 = vmatprep.subr.mxu0 0.0
  %596 = vmatpush1.msra.mxu0 0.0
  %597 = vmatprep.subr.mxu0 0.0
  %598 = vmatpush1.msra.mxu0 0.0
  %599 = vmatprep.subr.mxu0 0.0
  %600 = vmatpush1.msra.mxu0 0.0
  %601 = vmatprep.mubr.f32.mxu0 0.0
  %602 = vmatmul.mubr.f32.gmra.mrb[0].mxu0 %v464
  %v603 = vpop.f32.mrb[0].mxu0
  %v604 = vadd.f32 0.0, %v603
  %v605 = vpop.f32.mrb[0].mxu0
  %v606 = vadd.f32 0.0, %v605
  %607 = vdwg.mxu0
  %608 = vmatprep.subr.mxu0 %v413
  %609 = vmatpush1.msra.mxu0 %v412
  %610 = vmatprep.subr.mxu0 %v419
  %611 = vmatpush1.msra.mxu0 %v418
  %612 = vmatprep.subr.mxu0 %v425
  %613 = vmatpush1.msra.mxu0 %v424
  %614 = vmatprep.subr.mxu0 %v431
  %615 = vmatpush1.msra.mxu0 %v430
  %616 = vmatprep.subr.mxu0 %v437
  %617 = vmatpush1.msra.mxu0 %v436
  %618 = vmatprep.subr.mxu0 %v443
  %619 = vmatpush1.msra.mxu0 %v442
  %620 = vmatprep.subr.mxu0 %v449
  %621 = vmatpush1.msra.mxu0 %v448
  %622 = vmatprep.subr.mxu0 %v455
  %623 = vmatpush1.msra.mxu0 %v454
  %624 = vmatprep.subr.mxu0 %v461
  %625 = vmatpush1.msra.mxu0 %v460
  %626 = vmatprep.subr.mxu0 0.0
  %627 = vmatpush1.msra.mxu0 0.0
  %628 = vmatprep.subr.mxu0 0.0
  %629 = vmatpush1.msra.mxu0 0.0
  %630 = vmatprep.subr.mxu0 0.0
  %631 = vmatpush1.msra.mxu0 0.0
  %632 = vmatprep.subr.mxu0 0.0
  %633 = vmatpush1.msra.mxu0 0.0
  %634 = vmatprep.subr.mxu0 0.0
  %635 = vmatpush1.msra.mxu0 0.0
  %636 = vmatprep.subr.mxu0 0.0
  %637 = vmatpush1.msra.mxu0 0.0
  %638 = vmatprep.subr.mxu0 0.0
  %639 = vmatpush1.msra.mxu0 0.0
  %640 = vmatprep.subr.mxu0 0.0
  %641 = vmatpush1.msra.mxu0 0.0
  %642 = vmatprep.subr.mxu0 0.0
  %643 = vmatpush1.msra.mxu0 0.0
  %644 = vmatprep.subr.mxu0 0.0
  %645 = vmatpush1.msra.mxu0 0.0
  %646 = vmatprep.subr.mxu0 0.0
  %647 = vmatpush1.msra.mxu0 0.0
  %648 = vmatprep.subr.mxu0 0.0
  %649 = vmatpush1.msra.mxu0 0.0
  %650 = vmatprep.subr.mxu0 0.0
  %651 = vmatpush1.msra.mxu0 0.0
  %652 = vmatprep.subr.mxu0 0.0
  %653 = vmatpush1.msra.mxu0 0.0
  %654 = vmatprep.subr.mxu0 0.0
  %655 = vmatpush1.msra.mxu0 0.0
  %656 = vmatprep.subr.mxu0 0.0
  %657 = vmatpush1.msra.mxu0 0.0
  %658 = vmatprep.subr.mxu0 0.0
  %659 = vmatpush1.msra.mxu0 0.0
  %660 = vmatprep.subr.mxu0 0.0
  %661 = vmatpush1.msra.mxu0 0.0
  %662 = vmatprep.subr.mxu0 0.0
  %663 = vmatpush1.msra.mxu0 0.0
  %664 = vmatprep.subr.mxu0 0.0
  %665 = vmatpush1.msra.mxu0 0.0
  %666 = vmatprep.subr.mxu0 0.0
  %667 = vmatpush1.msra.mxu0 0.0
  %668 = vmatprep.subr.mxu0 0.0
  %669 = vmatpush1.msra.mxu0 0.0
  %670 = vmatprep.subr.mxu0 0.0
  %671 = vmatpush1.msra.mxu0 0.0
  %672 = vmatprep.mubr.f32.mxu0 0.0
  %673 = vmatmul.mubr.f32.gmra.mrb[0].mxu0 %v464
  %v674 = vpop.f32.mrb[0].mxu0
  %v675 = vadd.f32 0.0, %v674
  %v676 = vpop.f32.mrb[0].mxu0
  %v677 = vadd.f32 0.0, %v676
  %678 = vdwg.mxu0
  %v679 = vld [vmem:[%s2] sm:$0x3f]
  %v681 = vlaneseq
  %v682 = vshrl.u32 %v681, 7
  %v683 = vsub.s32 0, %v682
  %v684 = vrot.slane %v679, %v683
  %v685 = vlaneseq
  %v686 = vshrl.u32 %v685, 7
  %v687 = vsub.s32 1, %v686
  %v688 = vrot.slane %v679, %v687
  %v689 = vlaneseq
  %v690 = vshrl.u32 %v689, 7
  %v691 = vsub.s32 2, %v690
  %v692 = vrot.slane %v679, %v691
  %v693 = vlaneseq
  %v694 = vshrl.u32 %v693, 7
  %v695 = vsub.s32 3, %v694
  %v696 = vrot.slane %v679, %v695
  %v697 = vlaneseq
  %v698 = vshrl.u32 %v697, 7
  %v699 = vsub.s32 4, %v698
  %v700 = vrot.slane %v679, %v699
  %v701 = vlaneseq
  %v702 = vshrl.u32 %v701, 7
  %v703 = vsub.s32 5, %v702
  %v704 = vrot.slane %v679, %v703
  %v711 = vmul.f32 %v533, %v684
  %v712 = vmul.f32 %v535, %v688
  %v713 = vmul.f32 %v604, %v692
  %v714 = vmul.f32 %v606, %v696
  %v715 = vmul.f32 %v675, %v700
  %v716 = vmul.f32 %v677, %v704
  %vm717 = vcmask 1043456
  %v718 = vsel %vm717, %v711, 0.0
  %v719 = vsel %vm717, %v712, 0.0
  %v720 = vadd.f32 %v718, %v719
  %v721 = vsel %vm717, %v713, 0.0
  %v722 = vadd.f32 %v720, %v721
  %v723 = vsel %vm717, %v714, 0.0
  %v724 = vadd.f32 %v722, %v723
  %v725 = vsel %vm717, %v715, 0.0
  %v726 = vadd.f32 %v724, %v725
  %v727 = vsel %vm717, %v716, 0.0
  %v728 = vadd.f32 %v726, %v727
  %729 = vadd.xlane.f32.xlu0 %v728
  %v730 = vpop.xlane.xlu0 %729
  %v731 = vmul.f32 %v730, 0.001953125
  %v732 = vmul.f32 %v533, %v711
  %v733 = vmul.f32 %v535, %v712
  %v734 = vmul.f32 %v604, %v713
  %v735 = vmul.f32 %v606, %v714
  %v736 = vmul.f32 %v675, %v715
  %v737 = vmul.f32 %v677, %v716
  %v738 = vsel %vm717, %v732, 0.0
  %v739 = vsel %vm717, %v733, 0.0
  %v740 = vadd.f32 %v738, %v739
  %v741 = vsel %vm717, %v734, 0.0
  %v742 = vadd.f32 %v740, %v741
  %v743 = vsel %vm717, %v735, 0.0
  %v744 = vadd.f32 %v742, %v743
  %v745 = vsel %vm717, %v736, 0.0
  %v746 = vadd.f32 %v744, %v745
  %v747 = vsel %vm717, %v737, 0.0
  %v748 = vadd.f32 %v746, %v747
  %749 = vadd.xlane.f32.xlu0 %v748
  %v750 = vpop.xlane.xlu0 %749
  %v751 = vmul.f32 %v750, 0.001953125
  %v752 = vmul.f32 %v731, %v731
  %v753 = vsub.f32 %v751, %v752
  %v754 = vmax.f32 %v753, 0.0
  %v755 = vld [vmem:[%s4] sm:$0xf]
  %v756 = vadd.f32 %v754, 1e-05
  %v757 = vrsqrt.pop %v756
  %v758 = vmul.f32 %v755, %v757
  %v759 = vld [vmem:[%s5] sm:$0xf]
  %v760 = vmul.f32 %v731, %v758
  %v761 = vsub.f32 %v759, %v760
  %763 = vset.pattern.permute.xlu0 0
  %764 = vperm.xlu0 %763, %v758
  %v765 = vpop.permute.xlu0 %764
  %v767 = vmul.f32 %v533, %v765
  %v768 = vmul.f32 %v535, %v765
  %v769 = vmul.f32 %v604, %v765
  %v770 = vmul.f32 %v606, %v765
  %v771 = vmul.f32 %v675, %v765
  %v772 = vmul.f32 %v677, %v765
  %774 = vset.pattern.permute.xlu0 0
  %775 = vperm.xlu0 %774, %v761
  %v776 = vpop.permute.xlu0 %775
  %v778 = vadd.f32 %v767, %v776
  %v779 = vadd.f32 %v768, %v776
  %v780 = vadd.f32 %v769, %v776
  %v781 = vadd.f32 %v770, %v776
  %v782 = vadd.f32 %v771, %v776
  %v783 = vadd.f32 %v772, %v776
  %v784 = vld [vmem:[%s3] sm:$0xff]
  %v785 = vld [vmem:[%s3 + $0x8] sm:$0xff]
  %v786 = vld [vmem:[%s3 + $0x10] sm:$0xff]
  %v790 = vcombine.high %v784, %v784
  %v791 = vcombine.high %v785, %v785
  %v792 = vcombine.high %v786, %v786
  %v796 = vadd.f32 %v778, %v784
  %v797 = vadd.f32 %v779, %v790
  %v798 = vadd.f32 %v780, %v785
  %v799 = vadd.f32 %v781, %v791
  %v800 = vadd.f32 %v782, %v786
  %v801 = vadd.f32 %v783, %v792
  %v802 = vmax.f32 %v796, 0.0
  %v803 = vmax.f32 %v797, 0.0
  %v804 = vmax.f32 %v798, 0.0
  %v805 = vmax.f32 %v799, 0.0
  %v806 = vmax.f32 %v800, 0.0
  %v807 = vmax.f32 %v801, 0.0
  %v814 = vcombine.low %v802, %v803
  %v815 = vcombine.low %v804, %v805
  %v816 = vcombine.low %v806, %v807
  %820 = vst [vmem:[%s6] sm:$0xff] %v814
  %821 = vst [vmem:[%s6 + $0x8] sm:$0xff] %v815
  %822 = vst [vmem:[%s6 + $0x10] sm:$0xff] %v816
  // Predicated region
  $region26: #{res_block_forward.1} parent=0 // pred_check
    _
  $region27: #{res_block_forward.1} parent=0 // pred_check_branch
    %824 = sbr.rel (0) target = $region29
  $region28: #{res_block_forward.1} parent=0 // pred_region
    _
  $region29: #{res_block_forward.1} parent=0 // pred_fallthru
    _
  // Predicated region
  $region30: #{res_block_forward.1} parent=0 // pred_check
    _
  $region31: #{res_block_forward.1} parent=0 // pred_check_branch
    %826 = sbr.rel (0) target = $region33
  $region32: #{res_block_forward.1} parent=0 // pred_region
    _
  $region33: #{res_block_forward.1} parent=0 // pred_fallthru
    _

</llo_original>
